<compile_context>
chip_gen: v7x
topology: tpu7x:2x2x1
jax: 0.10.0
libtpu: 0.0.40
codegen_flags: <defaults>
</compile_context>

<pallas_src>
import jax
import jax.numpy as jnp
from jax import lax
from jax.experimental import pallas as pl
from jax.experimental.pallas import tpu as pltpu

_LANE = 128


def _round_up(x, m):
    return ((x + m - 1) // m) * m


def mlp_kernel(x_ref, w1_ref, b1_ref, w2_ref, b2_ref, o_ref):
    # x_ref : (tile_m, E)  (bf16 or f32)   w1_ref: (H, E) (same dtype as x)
    # b1_ref: (H, 1) f32   w2_ref: (H, 1) f32   b2_ref: (1,) f32 in SMEM
    # o_ref : (1, tile_m) f32  -- batch on the lane axis (lane-dense row)
    # h^T = W1 @ x^T : contract E on both operands -> (H, tile_m), f32 MXU accumulation.
    ht = lax.dot_general(
        w1_ref[...], x_ref[...],
        dimension_numbers=(((1,), (1,)), ((), ())),
        preferred_element_type=jnp.float32,
    )
    ht = jnp.maximum(ht + b1_ref[...], 0.0)           # bias lane-broadcast + ReLU (VPU)
    # Second layer: VPU multiply + sublane (XLU) reduce -> lane-dense (1, tile_m) row.
    o = jnp.sum(ht * w2_ref[...], axis=0, keepdims=True)
    o_ref[...] = (o + b2_ref[0]).astype(o_ref.dtype)


def regression_model_forward(x, w1, b1, w2, b2, *, tile_m=4096, cast_to_bf16=True):
    """Fused forward pass of RegressionModel.

    x : (N, E) activations.
    w1: (H, E)  == fc1.weight        b1: (H, 1) == fc1.bias[:, None]
    w2: (H, 1)  == fc2.weight.T      b2: (1,)   == fc2.bias
    Returns (N, 1) in x.dtype.
    """
    N, E = x.shape
    H = w1.shape[0]
    out_dtype = x.dtype

    # ---- tile selection (128-aligned lane-dense output blocks) -------------
    tile_m = max(_LANE, _round_up(min(int(tile_m), _round_up(N, _LANE)), _LANE))
    if N >= 2 * _LANE:
        # v7x has 2 TensorCores: keep >=2 grid steps on the parallel axis.
        tile_m = min(tile_m, _round_up(pl.cdiv(N, 2), _LANE))
    n_pad = _round_up(N, tile_m)
    grid = (n_pad // tile_m,)

    if n_pad != N:
        x = jnp.pad(x, ((0, n_pad - N), (0, 0)))      # zero rows, sliced off below

    # ---- dtype handling: bf16 for the streamed operand, f32 accumulation ---
    cdt = jnp.bfloat16 if cast_to_bf16 else x.dtype
    x_c = x.astype(cdt)
    w1_c = w1.astype(cdt)
    b1_f = b1.astype(jnp.float32)
    w2_f = w2.astype(jnp.float32)
    b2_f = b2.astype(jnp.float32)
    xb = jnp.dtype(cdt).itemsize

    # ---- explicit VMEM budget (E lane-pads to 128 in the streamed x tile) --
    x_tile_bytes = 2 * tile_m * max(_round_up(E, _LANE), _LANE) * xb   # double-buffered
    out_tile_bytes = 2 * 8 * tile_m * 4                                # (1, tile_m) f32, sublane-padded
    ht_bytes = _round_up(H, 8) * tile_m * 4                            # (H, tile_m) f32 intermediate
    resident_bytes = (_round_up(H, 8) * _round_up(E, _LANE) * xb
                      + 3 * _round_up(H, 8) * _LANE * 4)               # W1 + b1 + w2
    vmem_limit = int(min(48 << 20,
                         max(16 << 20,
                             2 * (x_tile_bytes + out_tile_bytes + ht_bytes + resident_bytes)
                             + (8 << 20))))

    cost = pl.CostEstimate(
        flops=2 * n_pad * H * E + 4 * n_pad * H,
        transcendentals=0,
        bytes_accessed=n_pad * E * xb + n_pad * 4 + H * E * xb + 2 * H * 4 + 4,
    )

    out_row = pl.pallas_call(
        mlp_kernel,
        out_shape=jax.ShapeDtypeStruct((1, n_pad), jnp.float32),
        grid_spec=pltpu.PrefetchScalarGridSpec(
            num_scalar_prefetch=0,
            grid=grid,
            in_specs=[
                pl.BlockSpec((tile_m, E), lambda i: (i, 0)),           # streamed x tile
                pl.BlockSpec((H, E), lambda i: (0, 0)),                # W1 (VMEM-resident)
                pl.BlockSpec((H, 1), lambda i: (0, 0)),                # b1 (resident)
                pl.BlockSpec((H, 1), lambda i: (0, 0)),                # W2 (resident)
                pl.BlockSpec(memory_space=pltpu.MemorySpace.SMEM),     # b2 scalar
            ],
            out_specs=pl.BlockSpec((1, tile_m), lambda i: (0, i)),     # lane-dense row
        ),
        compiler_params=pltpu.CompilerParams(
            dimension_semantics=("parallel",),
            vmem_limit_bytes=vmem_limit,
        ),
        cost_estimate=cost,
    )(x_c, w1_c, b1_f, w2_f, b2_f)

    return out_row[0, :N].reshape(N, 1).astype(out_dtype)


def init_params(key, embedding_dim, hidden_dim, dtype=jnp.float32):
    """Deterministic PyTorch-style init: U(-1/sqrt(fan_in), 1/sqrt(fan_in))."""
    k1, k2, k3, k4 = jax.random.split(key, 4)
    bound1 = 1.0 / jnp.sqrt(embedding_dim)
    bound2 = 1.0 / jnp.sqrt(hidden_dim)
    w1 = jax.random.uniform(k1, (hidden_dim, embedding_dim), dtype, -bound1, bound1)  # fc1.weight
    b1 = jax.random.uniform(k2, (hidden_dim, 1), dtype, -bound1, bound1)              # fc1.bias[:,None]
    w2 = jax.random.uniform(k3, (hidden_dim, 1), dtype, -bound2, bound2)              # fc2.weight.T
    b2 = jax.random.uniform(k4, (1,), dtype, -bound2, bound2)                         # fc2.bias
    return w1, b1, w2, b2


if __name__ == "__main__":
    # NOTE: this demo shape (N=16) is for correctness only; it is pure launch
    # overhead and must not be used for tile-size / perf conclusions.
    EMBEDDING_DIM = 32
    HIDDEN_DIM = 32
    BATCH = 16

    key = jax.random.PRNGKey(0)
    kx, kp = jax.random.split(key)
    x = jax.random.normal(kx, (BATCH, EMBEDDING_DIM), jnp.float32)
    w1, b1, w2, b2 = init_params(kp, EMBEDDING_DIM, HIDDEN_DIM)

    # Plain-JAX reference (same math as the PyTorch module).
    ref = jnp.maximum(x @ w1.T + b1[:, 0], 0.0) @ w2 + b2

    # 1) Exact f32 path — strict tolerance.
    out_f32 = regression_model_forward(x, w1, b1, w2, b2, cast_to_bf16=False)
    jax.block_until_ready(out_f32)
    assert out_f32.shape == (BATCH, 1)
    assert jnp.allclose(out_f32, ref, atol=1e-5, rtol=1e-5), "f32 path mismatch vs reference"

    # 2) Default bf16-input path (f32 accumulation) — loosened tolerance for the input cast.
    out_bf16 = regression_model_forward(x, w1, b1, w2, b2)
    jax.block_until_ready(out_bf16)
    assert out_bf16.shape == (BATCH, 1)
    assert jnp.allclose(out_bf16, ref, atol=5e-2, rtol=5e-2), "bf16 path mismatch vs reference"

    print("KERNEL_OK")
</pallas_src>

<mosaic_0001>
module attributes {stable_mosaic.version = 11 : i64} {
  func.func @mlp_kernel(%arg0: i32, %arg1: memref<128x32xf32, #tpu.memory_space<vmem>>, %arg2: memref<32x32xf32, #tpu.memory_space<vmem>>, %arg3: memref<32x1xf32, #tpu.memory_space<vmem>>, %arg4: memref<32x1xf32, #tpu.memory_space<vmem>>, %arg5: memref<1xf32, #tpu.memory_space<smem>>, %arg6: memref<1x128xf32, #tpu.memory_space<vmem>>) attributes {dimension_semantics = [#tpu.dimension_semantics<parallel>], iteration_bounds = array<i64: 1>, scalar_prefetch = 0 : i64, scratch_operands = 0 : i64, tpu.core_type = #tpu.core_type<tc>, window_params = [{transform_indices = @transform_0, window_bounds = array<i64: 128, 32>}, {pipeline_mode = #tpu.pipeline_mode<synchronous>, transform_indices = @transform_1, window_bounds = array<i64: 32, 32>}, {pipeline_mode = #tpu.pipeline_mode<synchronous>, transform_indices = @transform_2, window_bounds = array<i64: 32, 1>}, {pipeline_mode = #tpu.pipeline_mode<synchronous>, transform_indices = @transform_3, window_bounds = array<i64: 32, 1>}, {transform_indices = @transform_4, window_bounds = array<i64: 1>}, {transform_indices = @transform_5, window_bounds = array<i64: 1, 128>}]} {
    %c0 = arith.constant 0 : index
    %c0_0 = arith.constant 0 : index
    %0 = vector.load %arg2[%c0, %c0_0] : memref<32x32xf32, #tpu.memory_space<vmem>>, vector<32x32xf32>
    %c0_1 = arith.constant 0 : index
    %c0_2 = arith.constant 0 : index
    %1 = vector.load %arg1[%c0_1, %c0_2] : memref<128x32xf32, #tpu.memory_space<vmem>>, vector<128x32xf32>
    %cst = arith.constant dense<0.000000e+00> : vector<32x128xf32>
    %2 = tpu.matmul %0, %1, %cst {dimension_numbers = #tpu.dot_dimension_numbers<[1], [1], [0], [0], [0, 0, 1, 0], [], []>} : vector<32x32xf32>, vector<128x32xf32>, vector<32x128xf32> -> vector<32x128xf32>
    %c0_3 = arith.constant 0 : index
    %c0_4 = arith.constant 0 : index
    %3 = vector.load %arg3[%c0_3, %c0_4] : memref<32x1xf32, #tpu.memory_space<vmem>>, vector<32x1xf32>
    %4 = vector.broadcast %3 : vector<32x1xf32> to vector<32x128xf32>
    %5 = arith.addf %2, %4 : vector<32x128xf32>
    %cst_5 = arith.constant 0.000000e+00 : f32
    %6 = vector.broadcast %cst_5 : f32 to vector<32x128xf32>
    %7 = arith.maximumf %5, %6 : vector<32x128xf32>
    %c0_6 = arith.constant 0 : index
    %c0_7 = arith.constant 0 : index
    %8 = vector.load %arg4[%c0_6, %c0_7] : memref<32x1xf32, #tpu.memory_space<vmem>>, vector<32x1xf32>
    %9 = vector.broadcast %8 : vector<32x1xf32> to vector<32x128xf32>
    %10 = arith.mulf %7, %9 : vector<32x128xf32>
    %cst_8 = arith.constant dense<0.000000e+00> : vector<128xf32>
    %11 = vector.multi_reduction <add>, %10, %cst_8 [0] : vector<32x128xf32> to vector<128xf32>
    %12 = vector.shape_cast %11 : vector<128xf32> to vector<1x128xf32>
    %c0_9 = arith.constant 0 : index
    %13 = memref.load %arg5[%c0_9] : memref<1xf32, #tpu.memory_space<smem>>
    %14 = vector.broadcast %13 : f32 to vector<1x128xf32>
    %15 = arith.addf %12, %14 : vector<1x128xf32>
    %c0_10 = arith.constant 0 : index
    %c0_11 = arith.constant 0 : index
    %16 = vector.load %arg6[%c0_10, %c0_11] : memref<1x128xf32, #tpu.memory_space<vmem>>, vector<1x128xf32>
    tpu.vector_store %arg6[%c0_10, %c0_11], %15 {strides = array<i32>} : memref<1x128xf32, #tpu.memory_space<vmem>>, vector<1x128xf32>,
    return
  }
  func.func @transform_0(%arg0: i32) -> (i32, i32) {
    %c0_i32 = arith.constant 0 : i32
    %c0_i32_0 = arith.constant 0 : i32
    return %arg0, %c0_i32 : i32, i32
  }
  func.func @transform_1(%arg0: i32) -> (i32, i32) {
    %c0_i32 = arith.constant 0 : i32
    %c0_i32_0 = arith.constant 0 : i32
    %c0_i32_1 = arith.constant 0 : i32
    return %c0_i32, %c0_i32_0 : i32, i32
  }
  func.func @transform_2(%arg0: i32) -> (i32, i32) {
    %c0_i32 = arith.constant 0 : i32
    %c0_i32_0 = arith.constant 0 : i32
    %c0_i32_1 = arith.constant 0 : i32
    return %c0_i32, %c0_i32_0 : i32, i32
  }
  func.func @transform_3(%arg0: i32) -> (i32, i32) {
    %c0_i32 = arith.constant 0 : i32
    %c0_i32_0 = arith.constant 0 : i32
    %c0_i32_1 = arith.constant 0 : i32
    return %c0_i32, %c0_i32_0 : i32, i32
  }
  func.func @transform_4(%arg0: i32) -> i32 {
    %c0_i32 = arith.constant 0 : i32
    %c0_i32_0 = arith.constant 0 : i32
    return %c0_i32 : i32
  }
  func.func @transform_5(%arg0: i32) -> (i32, i32) {
    %c0_i32 = arith.constant 0 : i32
    %c0_i32_0 = arith.constant 0 : i32
    return %c0_i32, %arg0 : i32, i32
  }
}

</mosaic_0001>

<llo_original>
// kernel: tpu_custom_call.1
$region0: #{tpu_custom_call.1}
  #allocation0 [shape = 'u32[]', space=smem, size = 0x4, offset = 0x4, fixed_abs, tag = 'smem constant byte address 0x4 - core index']
  #allocation1 [shape = 'u32[144,128]{1,0:T(1,128)}', space=vmem, size = 0x12000, scoped, tag = 'internal scratch']
  #allocation2 [shape = 'f32[1]{0:T(128)S(6)}', space=smem, size = 0x200, scoped, tag = 'scoped memory for tpu_custom_call.1']
  %s0 = inlined_call_operand.vmem [shape: f32[128,32], index: 0, kind: input, shape index: {}]
  %s1 = inlined_call_operand.vmem [shape: f32[32,32], index: 1, kind: input, shape index: {}]
  %s2 = inlined_call_operand.vmem [shape: f32[32,1], index: 2, kind: input, shape index: {}]
  %s3 = inlined_call_operand.vmem [shape: f32[32,1], index: 3, kind: input, shape index: {}]
  %s4 = inlined_call_operand.<no memory space> [shape: f32[1], index: 4, kind: input, shape index: {}]
  %s5 = inlined_call_operand.hbm [shape: f32[1,128], index: 5, kind: output, shape index: {}]
  %s6 = sld [smem:[#allocation0]]
  $region30: #{tpu_custom_call.1} parent=0
    _
  %s8 = ssub.s32 1, %s6
  %s9 = scalar_select 0, %s8, %s6
  %10 = sst [smem:[#allocation2]] %s4
  $region1: #{tpu_custom_call.1} parent=0
    #allocation3 [shape = 'u8[512]{0}', space=vmem, size = 0x400, scoped, tag = 'output window, operand 0, single buffered']
    #allocation4 [shape = 's32[1]{0}', space=sflag, size = 0x4, scoped, tag = 'scoped memory for tpu_custom_call.1']
    %11 = vsyncpa [#allocation4], 0
    // Predicated region
    $region2: #{tpu_custom_call.1} parent=1 // pred_check
      _
    $region3: #{tpu_custom_call.1} parent=1 // pred_check_branch
      %13 = sbr.rel (0) target = $region5
    $region4: #{tpu_custom_call.1} parent=1 // pred_region
      _
    $region5: #{tpu_custom_call.1} parent=1 // pred_fallthru
      _
    // Predicated region
    $region6: #{tpu_custom_call.1} parent=1 // pred_check
      _
    $region7: #{tpu_custom_call.1} parent=1 // pred_check_branch
      %15 = sbr.rel (0) target = $region9
    $region8: #{tpu_custom_call.1} parent=1 // pred_region
      _
    $region9: #{tpu_custom_call.1} parent=1 // pred_fallthru
      _
    // Predicated region
    $region10: #{tpu_custom_call.1} parent=1 // pred_check
      _
    $region11: #{tpu_custom_call.1} parent=1 // pred_check_branch
      %17 = sbr.rel (0) target = $region13
    $region12: #{tpu_custom_call.1} parent=1 // pred_region
      _
    $region13: #{tpu_custom_call.1} parent=1 // pred_fallthru
      _
    // Predicated region
    $region14: #{tpu_custom_call.1} parent=1 // pred_check
      _
    $region15: #{tpu_custom_call.1} parent=1 // pred_check_branch
      %19 = sbr.rel (0) target = $region17
    $region16: #{tpu_custom_call.1} parent=1 // pred_region
      _
    $region17: #{tpu_custom_call.1} parent=1 // pred_fallthru
      _
    // Predicated region
    $region18: #{tpu_custom_call.1} parent=1 // pred_check
      _
    $region19: #{tpu_custom_call.1} parent=1 // pred_check_branch
      %21 = sbr.rel (0) target = $region21
    $region20: #{tpu_custom_call.1} parent=1 // pred_region
      _
    $region21: #{tpu_custom_call.1} parent=1 // pred_fallthru
      _
    %v22 = vld [vmem:[%s1] sm:$0xff]
    %v23 = vld [vmem:[%s1 + $0x8] sm:$0xff]
    %v24 = vld [vmem:[%s1 + $0x10] sm:$0xff]
    %v25 = vld [vmem:[%s1 + $0x18] sm:$0xff]
    %v26 = vld [vmem:[%s0] sm:$0xff]
    %v27 = vld [vmem:[%s0 + $0x8] sm:$0xff]
    %v28 = vld [vmem:[%s0 + $0x10] sm:$0xff]
    %v29 = vld [vmem:[%s0 + $0x18] sm:$0xff]
    %v30 = vld [vmem:[%s0 + $0x20] sm:$0xff]
    %v31 = vld [vmem:[%s0 + $0x28] sm:$0xff]
    %v32 = vld [vmem:[%s0 + $0x30] sm:$0xff]
    %v33 = vld [vmem:[%s0 + $0x38] sm:$0xff]
    %v34 = vld [vmem:[%s0 + $0x40] sm:$0xff]
    %v35 = vld [vmem:[%s0 + $0x48] sm:$0xff]
    %v36 = vld [vmem:[%s0 + $0x50] sm:$0xff]
    %v37 = vld [vmem:[%s0 + $0x58] sm:$0xff]
    %v38 = vld [vmem:[%s0 + $0x60] sm:$0xff]
    %v39 = vld [vmem:[%s0 + $0x68] sm:$0xff]
    %v40 = vld [vmem:[%s0 + $0x70] sm:$0xff]
    %v41 = vld [vmem:[%s0 + $0x78] sm:$0xff]
    %v42 = vld [vmem:[%s2] sm:$0xff]
    %v43 = vld [vmem:[%s2 + $0x8] sm:$0xff]
    %v44 = vld [vmem:[%s2 + $0x10] sm:$0xff]
    %v45 = vld [vmem:[%s2 + $0x18] sm:$0xff]
    %47 = vset.pattern.permute.xlu0 0
    %48 = vperm.xlu0 %47, %v42
    %v49 = vpop.permute.xlu0 %48
    %52 = vset.pattern.permute.xlu0 0
    %53 = vperm.xlu0 %52, %v43
    %v54 = vpop.permute.xlu0 %53
    %57 = vset.pattern.permute.xlu0 0
    %58 = vperm.xlu0 %57, %v44
    %v59 = vpop.permute.xlu0 %58
    %62 = vset.pattern.permute.xlu0 0
    %63 = vperm.xlu0 %62, %v45
    %v64 = vpop.permute.xlu0 %63
    %vm66 = vcmask 261120
    %v68 = vsel %vm66, %v22, 0
    %v71 = vsel %vm66, %v23, 0
    %v74 = vsel %vm66, %v24, 0
    %v77 = vsel %vm66, %v25, 0
    %v80 = vsel %vm66, %v26, 0
    %v83 = vsel %vm66, %v27, 0
    %v86 = vsel %vm66, %v28, 0
    %v89 = vsel %vm66, %v29, 0
    %v92 = vsel %vm66, %v30, 0
    %v95 = vsel %vm66, %v31, 0
    %v98 = vsel %vm66, %v32, 0
    %v101 = vsel %vm66, %v33, 0
    %v104 = vsel %vm66, %v34, 0
    %v107 = vsel %vm66, %v35, 0
    %v110 = vsel %vm66, %v36, 0
    %v113 = vsel %vm66, %v37, 0
    %v116 = vsel %vm66, %v38, 0
    %v119 = vsel %vm66, %v39, 0
    %v122 = vsel %vm66, %v40, 0
    %v125 = vsel %vm66, %v41, 0
    %127 = vmatprep.subr.mxu0 0.0
    %128 = vmatpush1.xpose.msra.mxu0 %v80
    %129 = vmatprep.subr.mxu0 0.0
    %130 = vmatpush1.xpose.msra.mxu0 %v83
    %131 = vmatprep.subr.mxu0 0.0
    %132 = vmatpush1.xpose.msra.mxu0 %v86
    %133 = vmatprep.subr.mxu0 0.0
    %134 = vmatpush1.xpose.msra.mxu0 %v89
    %135 = vmatprep.subr.mxu0 0.0
    %136 = vmatpush1.xpose.msra.mxu0 %v92
    %137 = vmatprep.subr.mxu0 0.0
    %138 = vmatpush1.xpose.msra.mxu0 %v95
    %139 = vmatprep.subr.mxu0 0.0
    %140 = vmatpush1.xpose.msra.mxu0 %v98
    %141 = vmatprep.subr.mxu0 0.0
    %142 = vmatpush1.xpose.msra.mxu0 %v101
    %143 = vmatprep.subr.mxu0 0.0
    %144 = vmatpush1.xpose.msra.mxu0 %v104
    %145 = vmatprep.subr.mxu0 0.0
    %146 = vmatpush1.xpose.msra.mxu0 %v107
    %147 = vmatprep.subr.mxu0 0.0
    %148 = vmatpush1.xpose.msra.mxu0 %v110
    %149 = vmatprep.subr.mxu0 0.0
    %150 = vmatpush1.xpose.msra.mxu0 %v113
    %151 = vmatprep.subr.mxu0 0.0
    %152 = vmatpush1.xpose.msra.mxu0 %v116
    %153 = vmatprep.subr.mxu0 0.0
    %154 = vmatpush1.xpose.msra.mxu0 %v119
    %155 = vmatprep.subr.mxu0 0.0
    %156 = vmatpush1.xpose.msra.mxu0 %v122
    %157 = vmatprep.subr.mxu0 0.0
    %158 = vmatpush1.xpose.msra.mxu0 %v125
    %159 = vmatprep.subr.mxu0 0.0
    %160 = vmatpush1.xpose.msra.mxu0 0.0
    %161 = vmatprep.subr.mxu0 0.0
    %162 = vmatpush1.xpose.msra.mxu0 0.0
    %163 = vmatprep.subr.mxu0 0.0
    %164 = vmatpush1.xpose.msra.mxu0 0.0
    %165 = vmatprep.subr.mxu0 0.0
    %166 = vmatpush1.xpose.msra.mxu0 0.0
    %167 = vmatprep.subr.mxu0 0.0
    %168 = vmatpush1.xpose.msra.mxu0 0.0
    %169 = vmatprep.subr.mxu0 0.0
    %170 = vmatpush1.xpose.msra.mxu0 0.0
    %171 = vmatprep.subr.mxu0 0.0
    %172 = vmatpush1.xpose.msra.mxu0 0.0
    %173 = vmatprep.subr.mxu0 0.0
    %174 = vmatpush1.xpose.msra.mxu0 0.0
    %175 = vmatprep.subr.mxu0 0.0
    %176 = vmatpush1.xpose.msra.mxu0 0.0
    %177 = vmatprep.subr.mxu0 0.0
    %178 = vmatpush1.xpose.msra.mxu0 0.0
    %179 = vmatprep.subr.mxu0 0.0
    %180 = vmatpush1.xpose.msra.mxu0 0.0
    %181 = vmatprep.subr.mxu0 0.0
    %182 = vmatpush1.xpose.msra.mxu0 0.0
    %183 = vmatprep.subr.mxu0 0.0
    %184 = vmatpush1.xpose.msra.mxu0 0.0
    %185 = vmatprep.subr.mxu0 0.0
    %186 = vmatpush1.xpose.msra.mxu0 0.0
    %187 = vmatprep.subr.mxu0 0.0
    %188 = vmatpush1.xpose.msra.mxu0 0.0
    %189 = vmatprep.subr.mxu0 0.0
    %190 = vmatpush1.xpose.msra.mxu0 0.0
    %191 = vmatprep.mubr.f32.mxu0 0.0
    %192 = vmatmul.mubr.f32.gmra.mrb[0].mxu0 %v68
    %v193 = vpop.f32.mrb[0].mxu0
    %v194 = vadd.f32 %v49, %v193
    %v195 = vpop.f32.mrb[0].mxu0
    %196 = vmatprep.mubr.f32.mxu0 0.0
    %197 = vmatmul.mubr.f32.gmra.mrb[0].mxu0 %v71
    %v198 = vpop.f32.mrb[0].mxu0
    %v199 = vadd.f32 %v54, %v198
    %v200 = vpop.f32.mrb[0].mxu0
    %201 = vmatprep.mubr.f32.mxu0 0.0
    %202 = vmatmul.mubr.f32.gmra.mrb[0].mxu0 %v74
    %v203 = vpop.f32.mrb[0].mxu0
    %v204 = vadd.f32 %v59, %v203
    %v205 = vpop.f32.mrb[0].mxu0
    %206 = vmatprep.mubr.f32.mxu0 0.0
    %207 = vmatmul.mubr.f32.gmra.mrb[0].mxu0 %v77
    %v208 = vpop.f32.mrb[0].mxu0
    %v209 = vadd.f32 %v64, %v208
    %v210 = vpop.f32.mrb[0].mxu0
    %211 = vdwg.mxu0
    %v212 = vmax.f32 %v194, 0.0
    %v213 = vmax.f32 %v199, 0.0
    %v214 = vmax.f32 %v204, 0.0
    %v215 = vmax.f32 %v209, 0.0
    %v216 = vld [vmem:[%s3] sm:$0xff]
    %v217 = vld [vmem:[%s3 + $0x8] sm:$0xff]
    %v218 = vld [vmem:[%s3 + $0x10] sm:$0xff]
    %v219 = vld [vmem:[%s3 + $0x18] sm:$0xff]
    %221 = vset.pattern.permute.xlu0 0
    %222 = vperm.xlu0 %221, %v216
    %v223 = vpop.permute.xlu0 %222
    %226 = vset.pattern.permute.xlu0 0
    %227 = vperm.xlu0 %226, %v217
    %v228 = vpop.permute.xlu0 %227
    %231 = vset.pattern.permute.xlu0 0
    %232 = vperm.xlu0 %231, %v218
    %v233 = vpop.permute.xlu0 %232
    %236 = vset.pattern.permute.xlu0 0
    %237 = vperm.xlu0 %236, %v219
    %v238 = vpop.permute.xlu0 %237
    %v240 = vmul.f32 %v212, %v223
    %v241 = vmul.f32 %v213, %v228
    %v242 = vmul.f32 %v214, %v233
    %v243 = vmul.f32 %v215, %v238
    %v244 = vadd.f32 %v240, %v241
    %v245 = vadd.f32 %v244, %v242
    %v246 = vadd.f32 %v245, %v243
    %v247 = vrot.slane %v246, 4
    %v248 = vadd.f32 %v246, %v247
    %v249 = vrot.slane %v248, 2
    %v250 = vadd.f32 %v248, %v249
    %v251 = vrot.slane %v250, 1
    %v252 = vadd.f32 %v250, %v251
    %s253 = sld [smem:[#allocation2]]
    %v254 = vstv %s253
    %v255 = vadd.f32 %v252, %v254
    %256 = vst [vmem:[#allocation3] sm:$0x1] %v255
    // Predicated region
    $region22: #{tpu_custom_call.1} parent=1 // pred_check
      _
    $region23: #{tpu_custom_call.1} parent=1 // pred_check_branch
      %258 = sbr.rel (0) target = $region25
    $region24: #{tpu_custom_call.1} parent=1 // pred_region
      %s260 = ssub.s32 16, 16
      %261 = vsyncadd [#allocation4], %s260
      %s263 = sshll.u32 [#allocation3], 4
      %s264 = int_to_ptr.vmem [resolvable:$true] %s263
      %266 = dma.vmem_to_hbm [thread:$0]  %s264, 16, %s5, [#allocation4]
    $region25: #{tpu_custom_call.1} parent=1 // pred_fallthru
      _
    // Predicated region
    $region26: #{tpu_custom_call.1} parent=1 // pred_check
      _
    $region27: #{tpu_custom_call.1} parent=1 // pred_check_branch
      %268 = sbr.rel (0) target = $region29
    $region28: #{tpu_custom_call.1} parent=1 // pred_region
      %269 = dma.done [#allocation4], 16
    $region29: #{tpu_custom_call.1} parent=1 // pred_fallthru
      _
    %270 = vsyncpa [#allocation4], 1

</llo_original>
